<compile_context>
chip_gen: v7x
topology: tpu7x:2x2x1
jax: 0.10.0
libtpu: 0.0.40
codegen_flags: <defaults>
</compile_context>

<pallas_src>
import jax
import jax.numpy as jnp
from jax import lax
from jax.experimental import pallas as pl
from jax.experimental.pallas import tpu as pltpu

KH = KW = 3      # kernel size
PAD = 1          # 'same' padding, stride 1
_CENTER = (KH // 2, KW // 2)


def _live_taps():
    """Kernel taps that survive the type-B mask (single source of truth)."""
    taps = []
    for kh in range(KH):
        for kw in range(KW):
            below_center = kh > _CENTER[0]
            right_of_center = (kh == _CENTER[0]) and (kw > _CENTER[1])
            if not (below_center or right_of_center):
                taps.append((kh, kw))
    return tuple(taps)


_LIVE_TAPS = _live_taps()   # ((0,0),(0,1),(0,2),(1,0),(1,1)) for 3x3 type B


def masked_conv_b_kernel(p_ref, w_ref, b_ref, o_ref):
    # p_ref: (1, K, T_HW)     im2col patches (live taps only) for one image/spatial tile
    # w_ref: (Cout, K)        flattened live-tap weights (constant-indexed -> resident)
    # b_ref: (Cout, 1)        bias, f32
    # o_ref: (1, Cout, T_HW)  lane-dense output tile (T_HW is a multiple of 128)
    #
    # Note: for Cout < 128 this (Cout,K)@(K,T) dot is MXU fill/drain dominated, but
    # such configs are HBM-bound anyway; orientation kept (best for Cout >= 128).
    acc = jnp.dot(w_ref[...], p_ref[0], preferred_element_type=jnp.float32)
    o_ref[0] = (acc + b_ref[...]).astype(o_ref.dtype)


def _pick_spatial_tile(hw_pad, k_rows, cout, bytes_in, bytes_out,
                       budget_bytes, min_tiles):
    """Largest 128-multiple tile that divides hw_pad and fits the VMEM budget."""
    per_lane = 2 * (k_rows * bytes_in + cout * bytes_out)        # 2 pipeline buffers
    resident = 2 * cout * k_rows * bytes_in + 2 * cout * 4        # weights + bias bufs
    t_cap = max(128, (budget_bytes - resident) // per_lane)
    t_cap = max(128, min(t_cap, hw_pad))
    if min_tiles > 1:
        t_cap = max(128, min(t_cap, hw_pad // min_tiles))
    t = max(128, t_cap - (t_cap % 128))
    while hw_pad % t != 0:
        t -= 128
    return t


def masked_conv_b(x_nchw, weight_oihw, bias, *, compute_dtype=jnp.bfloat16,
                  vmem_budget_bytes=20 << 20):
    """Type-B masked conv2d, stride 1, padding 1. x: (N,Cin,H,W) -> (N,Cout,H,W)."""
    N, Cin, H, W = x_nchw.shape
    Cout = weight_oihw.shape[0]
    HW = H * W
    n_taps = len(_LIVE_TAPS)
    K = n_taps * Cin
    out_dtype = x_nchw.dtype
    bytes_in = jnp.dtype(compute_dtype).itemsize
    bytes_out = jnp.dtype(out_dtype).itemsize

    # ---- host-side layout plumbing (no FLOPs beyond tap selection / cast) ----
    # Flattened live-tap weights: w2d[co, tap*Cin + ci] = weight[co, ci, kh, kw].
    w2d = jnp.stack([weight_oihw[:, :, kh, kw] for (kh, kw) in _LIVE_TAPS], axis=1)
    w2d = w2d.reshape(Cout, K).astype(compute_dtype)

    # Live-tap im2col slab (N, K, HW); tap-major / channel-minor ordering matches w2d.
    x_pad = jnp.pad(x_nchw, ((0, 0), (0, 0), (PAD, PAD), (PAD, PAD)))
    taps = [lax.slice(x_pad, (0, 0, kh, kw), (N, Cin, kh + H, kw + W))
            for (kh, kw) in _LIVE_TAPS]
    patches = jnp.stack(taps, axis=1).reshape(N, K, HW).astype(compute_dtype)

    # Pad spatial axis to a multiple of 128: lane-dense unmasked stores, bounded tiles.
    hw_pad = ((HW + 127) // 128) * 128
    if hw_pad != HW:
        patches = jnp.pad(patches, ((0, 0), (0, 0), (0, hw_pad - HW)))

    b2 = bias.reshape(Cout, 1).astype(jnp.float32)

    # ---- tiling / VMEM budget ----
    min_spatial_tiles = 2 if N == 1 else 1       # keep both v7x TensorCores busy
    t_hw = _pick_spatial_tile(hw_pad, K, Cout, bytes_in, bytes_out,
                              budget_bytes=vmem_budget_bytes,
                              min_tiles=min_spatial_tiles)
    grid = (N, hw_pad // t_hw)

    # Actual footprint (2 pipeline buffers for every operand) + headroom.
    vmem_need = (2 * (K * t_hw * bytes_in + Cout * t_hw * bytes_out)
                 + 2 * Cout * K * bytes_in + 2 * Cout * 4)
    vmem_limit = int(min(max(32 << 20, vmem_need + (8 << 20)), 100 << 20))

    cost = pl.CostEstimate(
        flops=2 * N * Cout * K * hw_pad,
        transcendentals=0,
        bytes_accessed=(N * K * hw_pad * bytes_in + Cout * K * bytes_in
                        + Cout * 4 + N * Cout * hw_pad * bytes_out))

    out = pl.pallas_call(
        masked_conv_b_kernel,
        out_shape=jax.ShapeDtypeStruct((N, Cout, hw_pad), out_dtype),
        grid=grid,
        in_specs=[
            pl.BlockSpec((1, K, t_hw), lambda n, s: (n, 0, s)),
            # Constant index maps: weights / bias are DMA'd once and stay resident.
            pl.BlockSpec((Cout, K), lambda n, s: (0, 0)),
            pl.BlockSpec((Cout, 1), lambda n, s: (0, 0)),
        ],
        out_specs=pl.BlockSpec((1, Cout, t_hw), lambda n, s: (n, 0, s)),
        compiler_params=pltpu.CompilerParams(
            dimension_semantics=("parallel", "parallel"),
            vmem_limit_bytes=vmem_limit),
        cost_estimate=cost,
    )(patches, w2d, b2)

    # Drop spatial padding (cheap slice), then a pure-view reshape back to NCHW.
    return out[:, :, :HW].reshape(N, Cout, H, W)


def _reference(x_nchw, weight_oihw, bias):
    # Pure-JAX reference: type-B masked Conv2d (NCHW / OIHW), stride 1, padding 1.
    mask = jnp.ones((KH, KW), jnp.float32)
    mask = mask.at[KH // 2, KW // 2 + 1:].set(0.0)
    mask = mask.at[KH // 2 + 1:, :].set(0.0)
    w = weight_oihw * mask[None, None, :, :]
    out = lax.conv_general_dilated(
        x_nchw, w, window_strides=(1, 1), padding=((PAD, PAD), (PAD, PAD)),
        dimension_numbers=("NCHW", "OIHW", "NCHW"))
    return out + bias[None, :, None, None]


if __name__ == "__main__":
    key = jax.random.PRNGKey(0)
    kx, kw, kb = jax.random.split(key, 3)

    N, Cin, Cout, H, W = 2, 4, 8, 16, 16
    x = jax.random.normal(kx, (N, Cin, H, W), dtype=jnp.float32)
    fan_in = Cin * KH * KW
    weight = jax.random.normal(kw, (Cout, Cin, KH, KW), dtype=jnp.float32) / jnp.sqrt(fan_in)
    bias = jax.random.normal(kb, (Cout,), dtype=jnp.float32) * 0.1

    ref = jax.block_until_ready(_reference(x, weight, bias))

    # f32 path (matches PyTorch Conv2d numerics).
    out_f32 = jax.block_until_ready(
        masked_conv_b(x, weight, bias, compute_dtype=jnp.float32))
    assert out_f32.shape == (N, Cout, H, W)
    assert jnp.allclose(out_f32, ref, atol=1e-4, rtol=1e-4), "f32 mismatch vs reference conv"

    # Default bf16 MXU path (f32 accumulation) — looser tolerance from bf16 rounding.
    out_bf16 = jax.block_until_ready(masked_conv_b(x, weight, bias))
    assert out_bf16.shape == (N, Cout, H, W)
    assert jnp.allclose(out_bf16, ref, atol=5e-2, rtol=5e-2), "bf16 mismatch vs reference conv"

    print("KERNEL_OK")
</pallas_src>

<mosaic_0001>
module attributes {stable_mosaic.version = 11 : i64} {
  func.func @masked_conv_b_kernel(%arg0: i32, %arg1: i32, %arg2: memref<1x20x256xf32, #tpu.memory_space<vmem>>, %arg3: memref<8x20xf32, #tpu.memory_space<vmem>>, %arg4: memref<8x1xf32, #tpu.memory_space<vmem>>, %arg5: memref<1x8x256xf32, #tpu.memory_space<vmem>>) attributes {dimension_semantics = [#tpu.dimension_semantics<parallel>, #tpu.dimension_semantics<parallel>], iteration_bounds = array<i64: 2, 1>, scalar_prefetch = 0 : i64, scratch_operands = 0 : i64, tpu.core_type = #tpu.core_type<tc>, window_params = [{transform_indices = @transform_0, window_bounds = array<i64: 1, 20, 256>}, {pipeline_mode = #tpu.pipeline_mode<synchronous>, transform_indices = @transform_1, window_bounds = array<i64: 8, 20>}, {pipeline_mode = #tpu.pipeline_mode<synchronous>, transform_indices = @transform_2, window_bounds = array<i64: 8, 1>}, {transform_indices = @transform_3, window_bounds = array<i64: 1, 8, 256>}]} {
    %c0 = arith.constant 0 : index
    %c0_0 = arith.constant 0 : index
    %0 = vector.load %arg3[%c0, %c0_0] : memref<8x20xf32, #tpu.memory_space<vmem>>, vector<8x20xf32>
    %c0_1 = arith.constant 0 : index
    %c0_2 = arith.constant 0 : index
    %c0_3 = arith.constant 0 : index
    %1 = vector.load %arg2[%c0_1, %c0_2, %c0_3] : memref<1x20x256xf32, #tpu.memory_space<vmem>>, vector<1x20x256xf32>
    %2 = vector.shape_cast %1 : vector<1x20x256xf32> to vector<20x256xf32>
    %cst = arith.constant dense<0.000000e+00> : vector<8x256xf32>
    %3 = tpu.matmul %0, %2, %cst {dimension_numbers = #tpu.dot_dimension_numbers<[1], [0], [0], [1], [0, 0, 1, 1], [], []>} : vector<8x20xf32>, vector<20x256xf32>, vector<8x256xf32> -> vector<8x256xf32>
    %c0_4 = arith.constant 0 : index
    %c0_5 = arith.constant 0 : index
    %4 = vector.load %arg4[%c0_4, %c0_5] : memref<8x1xf32, #tpu.memory_space<vmem>>, vector<8x1xf32>
    %5 = vector.broadcast %4 : vector<8x1xf32> to vector<8x256xf32>
    %6 = arith.addf %3, %5 : vector<8x256xf32>
    %c0_6 = arith.constant 0 : index
    %c0_7 = arith.constant 0 : index
    %c0_8 = arith.constant 0 : index
    %7 = vector.load %arg5[%c0_6, %c0_7, %c0_8] : memref<1x8x256xf32, #tpu.memory_space<vmem>>, vector<1x8x256xf32>
    %8 = vector.shape_cast %7 : vector<1x8x256xf32> to vector<8x256xf32>
    %9 = vector.shape_cast %6 : vector<8x256xf32> to vector<1x8x256xf32>
    tpu.vector_store %arg5[%c0_6, %c0_7, %c0_8], %9 {strides = array<i32>} : memref<1x8x256xf32, #tpu.memory_space<vmem>>, vector<1x8x256xf32>,
    return
  }
  func.func @transform_0(%arg0: i32, %arg1: i32) -> (i32, i32, i32) {
    %c0_i32 = arith.constant 0 : i32
    %c0_i32_0 = arith.constant 0 : i32
    return %arg0, %c0_i32, %arg1 : i32, i32, i32
  }
  func.func @transform_1(%arg0: i32, %arg1: i32) -> (i32, i32) {
    %c0_i32 = arith.constant 0 : i32
    %c0_i32_0 = arith.constant 0 : i32
    %c0_i32_1 = arith.constant 0 : i32
    return %c0_i32, %c0_i32_0 : i32, i32
  }
  func.func @transform_2(%arg0: i32, %arg1: i32) -> (i32, i32) {
    %c0_i32 = arith.constant 0 : i32
    %c0_i32_0 = arith.constant 0 : i32
    %c0_i32_1 = arith.constant 0 : i32
    return %c0_i32, %c0_i32_0 : i32, i32
  }
  func.func @transform_3(%arg0: i32, %arg1: i32) -> (i32, i32, i32) {
    %c0_i32 = arith.constant 0 : i32
    %c0_i32_0 = arith.constant 0 : i32
    return %arg0, %c0_i32, %arg1 : i32, i32, i32
  }
}

</mosaic_0001>

<llo_original>
// kernel: tpu_custom_call.1
$region0: #{tpu_custom_call.1}
  #allocation0 [shape = 'u32[]', space=smem, size = 0x4, offset = 0x4, fixed_abs, tag = 'smem constant byte address 0x4 - core index']
  #allocation1 [shape = 'u32[144,128]{1,0:T(1,128)}', space=vmem, size = 0x12000, scoped, tag = 'internal scratch']
  %s0 = inlined_call_operand.vmem [shape: f32[2,20,256], index: 0, kind: input, shape index: {}]
  %s1 = inlined_call_operand.vmem [shape: f32[8,20], index: 1, kind: input, shape index: {}]
  %s2 = inlined_call_operand.vmem [shape: f32[8,1], index: 2, kind: input, shape index: {}]
  %s3 = inlined_call_operand.hbm [shape: f32[2,8,256], index: 3, kind: output, shape index: {}]
  %s4 = sld [smem:[#allocation0]]
  $region45: #{tpu_custom_call.1} parent=0
    _
  %s6 = ssub.s32 1, %s4
  %s7 = scalar_select 0, %s6, %s4
  $region1: #{tpu_custom_call.1} parent=0
    #allocation2 [shape = 'u8[16384]{0}', space=vmem, size = 0x4000, scoped, tag = 'output window, operand 0']
    #allocation3 [shape = 's32[2]{0}', space=sflag, size = 0x8, scoped, tag = 'scoped memory for tpu_custom_call.1']
    %8 = vsyncpa [#allocation3], 0
    %s9 = scalar_lea.sflag [#allocation3], 1
    %10 = vsyncpa %s9, 0
    loop: start=0, step=1, limit=4
    $region2: #{tpu_custom_call.1} parent=1 // loop_pre_header
      _
    $region3: #{tpu_custom_call.1} parent=1 // loop_header
      %s12 = sphi 0, %s16
      %p13 = scmp.ge.s32.totalorder %s12, 4
      %s19 = sphi 0, %s31
      %s20 = sphi 0, %s27
      %s21 = sphi 0, %s19
      %s22 = sphi 0, %s20
      %s23 = sphi 0, %s21
      %s24 = sphi 0, %s22
      %s36 = sphi 0, %s38
      %s39 = sphi 0, %s36
      %s40 = sphi 0, %s39
      %s56 = sphi 0, %s40
      %s60 = sphi 0, %s60
      %s62 = sphi 0, %s60
      %s63 = sphi 0, %s62
      %s77 = sphi 0, %s63
      %s81 = sphi 0, %s81
      %s83 = sphi 0, %s81
      %s84 = sphi 0, %s83
      %s98 = sphi 0, %s84
      %s106 = sphi 0, %s108
      %s109 = sphi 0, %s106
      %s110 = sphi 0, %s109
      %s126 = sphi 0, %s110
    $region4: #{tpu_custom_call.1} parent=1 // loop_header_branch
      %15 = sbr.rel (%p13) target = $region8
    $region5: #{tpu_custom_call.1} parent=1 // loop_body
      %s17 = ssub.s32 %s12, 1
      %s18 = ssub.s32 %s12, 2
      %s25 = sadd.s32 1, %s20
      %p26 = scmp.ge.s32.totalorder %s25, 1
      %s27 = scalar_select %p26, 0, %s25
      %s28 = sadd.s32 1, %s19
      %s29 = scalar_select %p26, %s28, %s19
      %p30 = scmp.ge.s32.totalorder %s29, 2
      %s31 = scalar_select %p30, 0, %s29
      %s32 = ssub.s32 %s19, %s31
      %s33 = ssub.s32 %s20, %s27
      %s34 = sor.u32 %s32, %s33
      %p35 = scmp.eq.s32.totalorder %s34, 0
      %s37 = sadd.s32 %s36, 1
      %s38 = scalar_select %p35, %s36, %s37
      %p41 = pneg %p35
      %p42 = scmp.eq.s32.totalorder %s12, 1
      %p43 = por %p41, %p42
      %p44 = scmp.ne.s32.totalorder %s36, %s39
      %p45 = scmp.eq.s32.totalorder %s12, 0
      %p46 = por %p44, %p45
      %p47 = scmp.ne.s32.totalorder %s36, %s39
      %p48 = scmp.eq.s32.totalorder %s17, 1
      %p49 = por %p47, %p48
      %p50 = scmp.ne.s32.totalorder %s39, %s40
      %p51 = scmp.eq.s32.totalorder %s17, 0
      %p52 = por %p50, %p51
      %p53 = scmp.ne.s32.totalorder %s39, %s40
      %p54 = scmp.eq.s32.totalorder %s18, 1
      %p55 = por %p53, %p54
      %p57 = scmp.ne.s32.totalorder %s40, %s56
      %p58 = scmp.eq.s32.totalorder %s18, 0
      %p59 = por %p57, %p58
      %s61 = sadd.s32 %s60, 1
      %p64 = scmp.eq.s32.totalorder %s12, 1
      %p65 = scmp.ne.s32.totalorder %s60, %s62
      %p66 = scmp.eq.s32.totalorder %s12, 0
      %p67 = por %p65, %p66
      %p68 = scmp.ne.s32.totalorder %s60, %s62
      %p69 = scmp.eq.s32.totalorder %s17, 1
      %p70 = por %p68, %p69
      %p71 = scmp.ne.s32.totalorder %s62, %s63
      %p72 = scmp.eq.s32.totalorder %s17, 0
      %p73 = por %p71, %p72
      %p74 = scmp.ne.s32.totalorder %s62, %s63
      %p75 = scmp.eq.s32.totalorder %s18, 1
      %p76 = por %p74, %p75
      %p78 = scmp.ne.s32.totalorder %s63, %s77
      %p79 = scmp.eq.s32.totalorder %s18, 0
      %p80 = por %p78, %p79
      %s82 = sadd.s32 %s81, 1
      %p85 = scmp.eq.s32.totalorder %s12, 1
      %p86 = scmp.ne.s32.totalorder %s81, %s83
      %p87 = scmp.eq.s32.totalorder %s12, 0
      %p88 = por %p86, %p87
      %p89 = scmp.ne.s32.totalorder %s81, %s83
      %p90 = scmp.eq.s32.totalorder %s17, 1
      %p91 = por %p89, %p90
      %p92 = scmp.ne.s32.totalorder %s83, %s84
      %p93 = scmp.eq.s32.totalorder %s17, 0
      %p94 = por %p92, %p93
      %p95 = scmp.ne.s32.totalorder %s83, %s84
      %p96 = scmp.eq.s32.totalorder %s18, 1
      %p97 = por %p95, %p96
      %p99 = scmp.ne.s32.totalorder %s84, %s98
      %p100 = scmp.eq.s32.totalorder %s18, 0
      %p101 = por %p99, %p100
      %s102 = ssub.s32 %s19, %s31
      %s103 = ssub.s32 %s20, %s27
      %s104 = sor.u32 %s102, %s103
      %p105 = scmp.eq.s32.totalorder %s104, 0
      %s107 = sadd.s32 %s106, 1
      %s108 = scalar_select %p105, %s106, %s107
      %p111 = pneg %p105
      %p112 = scmp.eq.s32.totalorder %s12, 1
      %p113 = por %p111, %p112
      %p114 = scmp.ne.s32.totalorder %s106, %s109
      %p115 = scmp.eq.s32.totalorder %s12, 0
      %p116 = por %p114, %p115
      %p117 = scmp.ne.s32.totalorder %s106, %s109
      %p118 = scmp.eq.s32.totalorder %s17, 1
      %p119 = por %p117, %p118
      %p120 = scmp.ne.s32.totalorder %s109, %s110
      %p121 = scmp.eq.s32.totalorder %s17, 0
      %p122 = por %p120, %p121
      %p123 = scmp.ne.s32.totalorder %s109, %s110
      %p124 = scmp.eq.s32.totalorder %s18, 1
      %p125 = por %p123, %p124
      %p127 = scmp.ne.s32.totalorder %s110, %s126
      %p128 = scmp.eq.s32.totalorder %s18, 0
      %p129 = por %p127, %p128
      %p130 = scmp.le.s32.totalorder 1, %s12
      %p131 = scmp.lt.s32.totalorder %s12, 3
      %p132 = pnand %p130, %p131
      %p133 = pneg %p132
      // Predicated region
      $region9: #{tpu_custom_call.1} parent=5 // pred_check
        _
      $region10: #{tpu_custom_call.1} parent=5 // pred_check_branch
        %135 = sbr.rel (%p132) target = $region12
      $region11: #{tpu_custom_call.1} parent=5 // pred_region
        %s136 = ssub.s32 %s12, 1
        // Predicated region
        $region13: #{tpu_custom_call.1} parent=11 // pred_check
          %p137 = pneg %p73
        $region14: #{tpu_custom_call.1} parent=11 // pred_check_branch
          %139 = sbr.rel (%p137) target = $region16
        $region15: #{tpu_custom_call.1} parent=11 // pred_region
          _
        $region16: #{tpu_custom_call.1} parent=11 // pred_fallthru
          _
        // Predicated region
        $region17: #{tpu_custom_call.1} parent=11 // pred_check
          %p140 = pneg %p94
        $region18: #{tpu_custom_call.1} parent=11 // pred_check_branch
          %142 = sbr.rel (%p140) target = $region20
        $region19: #{tpu_custom_call.1} parent=11 // pred_region
          _
        $region20: #{tpu_custom_call.1} parent=11 // pred_fallthru
          _
      $region12: #{tpu_custom_call.1} parent=5 // pred_fallthru
        _
      %p143 = scmp.lt.s32.totalorder %s12, 2
      // Predicated region
      $region21: #{tpu_custom_call.1} parent=5 // pred_check
        %p144 = pneg %p143
      $region22: #{tpu_custom_call.1} parent=5 // pred_check_branch
        %146 = sbr.rel (%p144) target = $region24
      $region23: #{tpu_custom_call.1} parent=5 // pred_region
        // Predicated region
        $region25: #{tpu_custom_call.1} parent=23 // pred_check
          %p147 = pneg %p46
        $region26: #{tpu_custom_call.1} parent=23 // pred_check_branch
          %149 = sbr.rel (%p147) target = $region28
        $region27: #{tpu_custom_call.1} parent=23 // pred_region
          %s150 = smul.u32 2, %s20
          %p151 = scmp.lt.s32.totalorder %s19, 1
          %s152 = scalar_select %p151, %s19, 1
          %p153 = scmp.lt.s32.totalorder %s150, 1
          %s154 = scalar_select %p153, %s150, 1
          %s155 = smul.addr %s152, 6
          %s156 = sadd.s32 %s154, %s155
          %s157 = smul.addr %s156, 8
          %s158 = scalar_lea.vmem %s0, %s157
          %s159 = smul.u32 2, %s20
        $region28: #{tpu_custom_call.1} parent=23 // pred_fallthru
          _
      $region24: #{tpu_custom_call.1} parent=5 // pred_fallthru
        _
      %p160 = scmp.le.s32.totalorder 1, %s12
      %p161 = scmp.lt.s32.totalorder %s12, 3
      %p162 = pnand %p160, %p161
      %p163 = pneg %p162
      // Predicated region
      $region29: #{tpu_custom_call.1} parent=5 // pred_check
        _
      $region30: #{tpu_custom_call.1} parent=5 // pred_check_branch
        %165 = sbr.rel (%p162) target = $region32
      $region31: #{tpu_custom_call.1} parent=5 // pred_region
        %s166 = ssub.s32 %s12, 1
        %s167 = smul.u32 2, %s22
        %p168 = scmp.lt.s32.totalorder %s21, 1
        %s169 = scalar_select %p168, %s21, 1
        %p170 = scmp.lt.s32.totalorder %s167, 1
        %s171 = scalar_select %p170, %s167, 1
        %s172 = smul.addr %s169, 6
        %s173 = sadd.s32 %s171, %s172
        %s174 = smul.addr %s173, 8
        %s175 = scalar_lea.vmem %s0, %s174
        %p176 = pneg %p52
        %p177 = pneg %p49
        %p178 = pneg %p73
        %p179 = pneg %p70
        %p180 = pneg %p94
        %p181 = pneg %p91
        %p182 = pneg %p122
        %p183 = pneg %p119
        %s184 = sand.u32 %s109, 1
        %s185 = scalar_lea.sflag [#allocation3], %s184
        %s186 = sand.u32 %s109, 1
        %s187 = smul.addr %s186, 16
        %s188 = scalar_lea.vmem [#allocation2], %s187
        %s189 = smul.u32 2, %s22
        %p190 = scmp.lt.s32.totalorder %s21, 1
        %s191 = scalar_select %p190, %s21, 1
        %p192 = scmp.lt.s32.totalorder %s189, 1
        %s193 = scalar_select %p192, %s189, 1
        %s194 = smul.addr %s191, 6
        %s195 = sadd.s32 %s193, %s194
        %s196 = smul.addr %s195, 8
        %s197 = scalar_lea.vmem %s0, %s196
        %s198 = smul.u32 2, %s22
        %s199 = smul.u32 2, %s22
        %v200 = vld [vmem:[%s1] sm:$0xff]
        %v201 = vld [vmem:[%s197] sm:$0xff]
        %v202 = vld [vmem:[%s197 + $0x8] sm:$0xff]
        %v203 = vld [vmem:[%s197 + $0x10] sm:$0xff]
        %v204 = vld [vmem:[%s197 + $0x18] sm:$0xff]
        %v205 = vld [vmem:[%s197 + $0x20] sm:$0xf]
        %v206 = vld [vmem:[%s197 + $0x28] sm:$0xf]
        %v207 = vld [vmem:[%s2] sm:$0xff]
        %209 = vset.pattern.permute.xlu0 0
        %210 = vperm.xlu0 %209, %v207
        %v211 = vpop.permute.xlu0 %210
        %vm213 = vcmask 162816
        %v215 = vsel %vm213, %v200, 0
        %vm217 = vcmask 1043456
        %v219 = vsel %vm217, %v205, 0
        %v222 = vsel %vm217, %v206, 0
        %224 = vmatprep.subr.mxu0 %v202
        %225 = vmatpush1.msra.mxu0 %v201
        %226 = vmatprep.subr.mxu0 %v204
        %227 = vmatpush1.msra.mxu0 %v203
        %228 = vmatprep.subr.mxu0 %v222
        %229 = vmatpush1.msra.mxu0 %v219
        %230 = vmatprep.subr.mxu0 0.0
        %231 = vmatpush1.msra.mxu0 0.0
        %232 = vmatprep.subr.mxu0 0.0
        %233 = vmatpush1.msra.mxu0 0.0
        %234 = vmatprep.subr.mxu0 0.0
        %235 = vmatpush1.msra.mxu0 0.0
        %236 = vmatprep.subr.mxu0 0.0
        %237 = vmatpush1.msra.mxu0 0.0
        %238 = vmatprep.subr.mxu0 0.0
        %239 = vmatpush1.msra.mxu0 0.0
        %240 = vmatprep.subr.mxu0 0.0
        %241 = vmatpush1.msra.mxu0 0.0
        %242 = vmatprep.subr.mxu0 0.0
        %243 = vmatpush1.msra.mxu0 0.0
        %244 = vmatprep.subr.mxu0 0.0
        %245 = vmatpush1.msra.mxu0 0.0
        %246 = vmatprep.subr.mxu0 0.0
        %247 = vmatpush1.msra.mxu0 0.0
        %248 = vmatprep.subr.mxu0 0.0
        %249 = vmatpush1.msra.mxu0 0.0
        %250 = vmatprep.subr.mxu0 0.0
        %251 = vmatpush1.msra.mxu0 0.0
        %252 = vmatprep.subr.mxu0 0.0
        %253 = vmatpush1.msra.mxu0 0.0
        %254 = vmatprep.subr.mxu0 0.0
        %255 = vmatpush1.msra.mxu0 0.0
        %256 = vmatprep.subr.mxu0 0.0
        %257 = vmatpush1.msra.mxu0 0.0
        %258 = vmatprep.subr.mxu0 0.0
        %259 = vmatpush1.msra.mxu0 0.0
        %260 = vmatprep.subr.mxu0 0.0
        %261 = vmatpush1.msra.mxu0 0.0
        %262 = vmatprep.subr.mxu0 0.0
        %263 = vmatpush1.msra.mxu0 0.0
        %264 = vmatprep.subr.mxu0 0.0
        %265 = vmatpush1.msra.mxu0 0.0
        %266 = vmatprep.subr.mxu0 0.0
        %267 = vmatpush1.msra.mxu0 0.0
        %268 = vmatprep.subr.mxu0 0.0
        %269 = vmatpush1.msra.mxu0 0.0
        %270 = vmatprep.subr.mxu0 0.0
        %271 = vmatpush1.msra.mxu0 0.0
        %272 = vmatprep.subr.mxu0 0.0
        %273 = vmatpush1.msra.mxu0 0.0
        %274 = vmatprep.subr.mxu0 0.0
        %275 = vmatpush1.msra.mxu0 0.0
        %276 = vmatprep.subr.mxu0 0.0
        %277 = vmatpush1.msra.mxu0 0.0
        %278 = vmatprep.subr.mxu0 0.0
        %279 = vmatpush1.msra.mxu0 0.0
        %280 = vmatprep.subr.mxu0 0.0
        %281 = vmatpush1.msra.mxu0 0.0
        %282 = vmatprep.subr.mxu0 0.0
        %283 = vmatpush1.msra.mxu0 0.0
        %284 = vmatprep.subr.mxu0 0.0
        %285 = vmatpush1.msra.mxu0 0.0
        %286 = vmatprep.subr.mxu0 0.0
        %287 = vmatpush1.msra.mxu0 0.0
        %288 = vmatprep.mubr.f32.mxu0 0.0
        %289 = vmatmul.mubr.f32.gmra.mrb[0].mxu0 %v215
        %v290 = vpop.f32.mrb[0].mxu0
        %v291 = vadd.f32 %v211, %v290
        %v292 = vpop.f32.mrb[0].mxu0
        %v293 = vadd.f32 %v211, %v292
        %294 = vdwg.mxu0
        %295 = vst [vmem:[%s188] sm:$0xff] %v291
        %296 = vst [vmem:[%s188 + $0x8] sm:$0xff] %v293
        %s297 = sand.u32 %s109, 1
        %s298 = scalar_lea.sflag [#allocation3], %s297
        %s299 = sand.u32 %s109, 1
        %s300 = smul.addr %s299, 16
        %s301 = scalar_lea.vmem [#allocation2], %s300
        // Predicated region
        $region33: #{tpu_custom_call.1} parent=31 // pred_check
          %p302 = pneg %p119
        $region34: #{tpu_custom_call.1} parent=31 // pred_check_branch
          %304 = sbr.rel (%p302) target = $region36
        $region35: #{tpu_custom_call.1} parent=31 // pred_region
          %s305 = smul.u32 2, %s22
          %s307 = ssub.s32 256, 256
          %308 = vsyncadd %s298, %s307
          %s309 = smul.addr %s21, 2
          %s310 = sadd.s32 %s305, %s309
          %s311 = smul.addr %s310, 128
          %s312 = scalar_lea.hbm %s3, %s311
          %s314 = sshll.u32 %s301, 4
          %s315 = int_to_ptr.vmem [resolvable:$true] %s314
          %317 = dma.vmem_to_hbm [thread:$0]  %s315, 256, %s312, %s298
        $region36: #{tpu_custom_call.1} parent=31 // pred_fallthru
          _
      $region32: #{tpu_custom_call.1} parent=5 // pred_fallthru
        _
      %p318 = scmp.le.s32.totalorder 2, %s12
      // Predicated region
      $region37: #{tpu_custom_call.1} parent=5 // pred_check
        %p319 = pneg %p318
      $region38: #{tpu_custom_call.1} parent=5 // pred_check_branch
        %321 = sbr.rel (%p319) target = $region40
      $region39: #{tpu_custom_call.1} parent=5 // pred_region
        %s322 = ssub.s32 %s12, 2
        // Predicated region
        $region41: #{tpu_custom_call.1} parent=39 // pred_check
          %p323 = pneg %p125
        $region42: #{tpu_custom_call.1} parent=39 // pred_check_branch
          %325 = sbr.rel (%p323) target = $region44
        $region43: #{tpu_custom_call.1} parent=39 // pred_region
          %s326 = sand.u32 %s110, 1
          %s327 = scalar_lea.sflag [#allocation3], %s326
          %s328 = sand.u32 %s110, 1
          %s329 = smul.addr %s328, 16
          %s330 = scalar_lea.vmem [#allocation2], %s329
          %331 = dma.done %s327, 256
        $region44: #{tpu_custom_call.1} parent=39 // pred_fallthru
          _
      $region40: #{tpu_custom_call.1} parent=5 // pred_fallthru
        _
    $region6: #{tpu_custom_call.1} parent=1 // loop_footer
      %s16 = sadd.s32 1, %s12
    $region7: #{tpu_custom_call.1} parent=1 // loop_footer_branch
      %11 = sbr.rel target = $region3
    $region8: #{tpu_custom_call.1} parent=1 // loop_exit
      _
    %332 = vsyncpa [#allocation3], 1
    %s333 = scalar_lea.sflag [#allocation3], 1
    %334 = vsyncpa %s333, 1

</llo_original>
